<compile_context>
chip_gen: v7x
topology: tpu7x:2x2x1
jax: 0.10.0
libtpu: 0.0.40
codegen_flags: <defaults>
</compile_context>

<pallas_src>
import jax
import jax.numpy as jnp
from jax.experimental import pallas as pl
from jax.experimental.pallas import tpu as pltpu


def _round_up(x, m):
    return (x + m - 1) // m * m


def _attention_kernel(q_ref,        # (Bt, Tq, Hp)  query block
                      enc_ref,      # (Bt, Ts, Hp)  encoder outputs block
                      mask_ref,     # (Bt, 1,  Ts)  additive length mask (0 / -inf)
                      w_in_t_ref,   # (Hp, Hp)      linear_in.weight^T (padded)
                      w_out_t_ref,  # (2*Hp, Hp)    linear_out.weight^T (padded, split-packed)
                      b_out_ref,    # (1, Hp)       linear_out.bias (padded)
                      o_ref):       # (Bt, Tq, Hp)
    bt, tq, hp = q_ref.shape
    q = q_ref[...]
    enc = enc_ref[...]

    # linear_in (no bias): one flattened-row matmul, weight pre-transposed.
    qp_flat = jnp.dot(q.reshape(bt * tq, hp), w_in_t_ref[...],
                      preferred_element_type=jnp.float32)          # (Bt*Tq, Hp)
    qp = qp_flat.reshape(bt, tq, hp)

    # attention scores: contract hidden dims directly (no enc^T materialization).
    s = jnp.einsum('bqh,bsh->bqs', qp, enc,
                   preferred_element_type=jnp.float32)              # (Bt, Tq, Ts)
    s = s + mask_ref[...]                                           # broadcast over Tq

    # numerically stable softmax over source positions
    m = jnp.max(s, axis=-1, keepdims=True)
    e = jnp.exp(s - m)
    denom = jnp.sum(e, axis=-1, keepdims=True)
    align = e * pl.reciprocal(denom, approx=False)

    # context vectors
    c = jnp.einsum('bqs,bsh->bqh', align, enc,
                   preferred_element_type=jnp.float32)              # (Bt, Tq, Hp)

    # linear_out on concat([c, q']): single K = 2*Hp matmul + bias, then tanh.
    cat = jnp.concatenate([c.reshape(bt * tq, hp), qp_flat], axis=-1)   # (Bt*Tq, 2*Hp)
    out = jnp.dot(cat, w_out_t_ref[...], preferred_element_type=jnp.float32)
    out = out + b_out_ref[...]
    o_ref[...] = jnp.tanh(out).reshape(bt, tq, hp).astype(o_ref.dtype)


def attention_pallas(query, encoder_outputs, src_lengths, w_in, w_out, b_out,
                     *, block_b=8):
    """query: (B, Tq, H), encoder_outputs: (B, Ts, H), src_lengths: (B,) int,
    w_in: (H, H), w_out: (H, 2H), b_out: (H,). Returns (B, Tq, H)."""
    B, Tq, H = query.shape
    _, Ts, _ = encoder_outputs.shape
    f32 = jnp.float32

    Hp = _round_up(H, 128)            # lane-dense hidden dim
    Bt = min(block_b, B)              # batch elements per grid step
    Bp = _round_up(B, Bt)

    # --- pad activations (hidden -> Hp, batch -> Bp) ---
    q_p = jnp.pad(query.astype(f32), ((0, Bp - B), (0, 0), (0, Hp - H)))
    enc_p = jnp.pad(encoder_outputs.astype(f32), ((0, Bp - B), (0, 0), (0, Hp - H)))

    # --- additive length mask: 0 where pos < length, -inf otherwise ---
    lens = jnp.pad(src_lengths.astype(jnp.int32), (0, Bp - B), constant_values=Ts)
    pos = jnp.arange(Ts, dtype=jnp.int32)[None, :]
    mask = jnp.where(pos < lens[:, None], 0.0, -jnp.inf).astype(f32)[:, None, :]  # (Bp,1,Ts)

    # --- pre-transposed, zero-padded weights ---
    # linear_in:  y = x @ W_in^T         -> pass W_in^T padded to (Hp, Hp)
    w_in_t = jnp.zeros((Hp, Hp), f32).at[:H, :H].set(w_in.T.astype(f32))
    # linear_out: y = cat([c, q']) @ W_out^T ; pack the two K-halves at rows
    # [0:H] (context) and [Hp:Hp+H] (query') so cat([c_pad, qp_pad]) lines up.
    w_out_t = jnp.zeros((2 * Hp, Hp), f32)
    w_out_t = w_out_t.at[:H, :H].set(w_out[:, :H].T.astype(f32))
    w_out_t = w_out_t.at[Hp:Hp + H, :H].set(w_out[:, H:].T.astype(f32))
    b_out_p = jnp.zeros((1, Hp), f32).at[0, :H].set(b_out.astype(f32))

    grid = (Bp // Bt,)
    out = pl.pallas_call(
        _attention_kernel,
        out_shape=jax.ShapeDtypeStruct((Bp, Tq, Hp), query.dtype),
        grid_spec=pltpu.PrefetchScalarGridSpec(
            num_scalar_prefetch=0,
            grid=grid,
            in_specs=[
                pl.BlockSpec((Bt, Tq, Hp), lambda b: (b, 0, 0)),   # query
                pl.BlockSpec((Bt, Ts, Hp), lambda b: (b, 0, 0)),   # encoder outputs
                pl.BlockSpec((Bt, 1, Ts), lambda b: (b, 0, 0)),    # additive mask
                pl.BlockSpec((Hp, Hp), lambda b: (0, 0)),          # W_in^T (resident)
                pl.BlockSpec((2 * Hp, Hp), lambda b: (0, 0)),      # W_out^T (resident)
                pl.BlockSpec((1, Hp), lambda b: (0, 0)),           # bias (resident)
            ],
            out_specs=pl.BlockSpec((Bt, Tq, Hp), lambda b: (b, 0, 0)),
        ),
        compiler_params=pltpu.CompilerParams(
            dimension_semantics=("parallel",)),   # batch steps split across TCs on v7x
    )(q_p, enc_p, mask, w_in_t, w_out_t, b_out_p)

    return out[:B, :, :H]


def attention_reference(query, encoder_outputs, src_lengths, w_in, w_out, b_out):
    """Pure-JAX reference mirroring the PyTorch forward."""
    Ts = encoder_outputs.shape[1]
    qp = jnp.einsum("bth,oh->bto", query, w_in)
    scores = jnp.einsum("bth,bsh->bts", qp, encoder_outputs)
    mask = jnp.arange(Ts)[None, None, :] >= src_lengths[:, None, None]
    scores = jnp.where(mask, -jnp.inf, scores)
    align = jax.nn.softmax(scores, axis=-1)
    c = jnp.einsum("bts,bsh->bth", align, encoder_outputs)
    cat = jnp.concatenate([c, qp], axis=-1)
    return jnp.tanh(jnp.einsum("btk,ok->bto", cat, w_out) + b_out)


if __name__ == "__main__":
    B, Tq, Ts, H = 2, 8, 8, 32

    key = jax.random.PRNGKey(0)
    k1, k2, k3, k4, k5 = jax.random.split(key, 5)

    query = jax.random.normal(k1, (B, Tq, H), dtype=jnp.float32)
    encoder_outputs = jax.random.normal(k2, (B, Ts, H), dtype=jnp.float32)
    src_lengths = jnp.array([Ts, 5], dtype=jnp.int32)  # max == Ts, like PyTorch mask

    # PyTorch nn.Linear default init: U(-1/sqrt(fan_in), 1/sqrt(fan_in))
    bound_in = 1.0 / (H ** 0.5)
    bound_out = 1.0 / ((2 * H) ** 0.5)
    w_in = jax.random.uniform(k3, (H, H), jnp.float32, -bound_in, bound_in)
    w_out = jax.random.uniform(k4, (H, 2 * H), jnp.float32, -bound_out, bound_out)
    b_out = jax.random.uniform(k5, (H,), jnp.float32, -bound_out, bound_out)

    out = attention_pallas(query, encoder_outputs, src_lengths, w_in, w_out, b_out)
    out = jax.block_until_ready(out)

    ref = attention_reference(query, encoder_outputs, src_lengths, w_in, w_out, b_out)
    assert out.shape == (B, Tq, H)
    assert jnp.allclose(out, ref, atol=1e-5, rtol=1e-5), "mismatch vs reference"

    print("KERNEL_OK")
</pallas_src>

<mosaic_0001>
module attributes {stable_mosaic.version = 11 : i64} {
  func.func @_attention_kernel(%arg0: i32, %arg1: memref<2x8x128xf32, #tpu.memory_space<vmem>>, %arg2: memref<2x8x128xf32, #tpu.memory_space<vmem>>, %arg3: memref<2x1x8xf32, #tpu.memory_space<vmem>>, %arg4: memref<128x128xf32, #tpu.memory_space<vmem>>, %arg5: memref<256x128xf32, #tpu.memory_space<vmem>>, %arg6: memref<1x128xf32, #tpu.memory_space<vmem>>, %arg7: memref<2x8x128xf32, #tpu.memory_space<vmem>>) attributes {dimension_semantics = [#tpu.dimension_semantics<parallel>], iteration_bounds = array<i64: 1>, scalar_prefetch = 0 : i64, scratch_operands = 0 : i64, tpu.core_type = #tpu.core_type<tc>, window_params = [{transform_indices = @transform_0, window_bounds = array<i64: 2, 8, 128>}, {transform_indices = @transform_1, window_bounds = array<i64: 2, 8, 128>}, {transform_indices = @transform_2, window_bounds = array<i64: 2, 1, 8>}, {pipeline_mode = #tpu.pipeline_mode<synchronous>, transform_indices = @transform_3, window_bounds = array<i64: 128, 128>}, {pipeline_mode = #tpu.pipeline_mode<synchronous>, transform_indices = @transform_4, window_bounds = array<i64: 256, 128>}, {pipeline_mode = #tpu.pipeline_mode<synchronous>, transform_indices = @transform_5, window_bounds = array<i64: 1, 128>}, {transform_indices = @transform_6, window_bounds = array<i64: 2, 8, 128>}]} {
    %c0 = arith.constant 0 : index
    %c0_0 = arith.constant 0 : index
    %c0_1 = arith.constant 0 : index
    %0 = vector.load %arg1[%c0, %c0_0, %c0_1] : memref<2x8x128xf32, #tpu.memory_space<vmem>>, vector<2x8x128xf32>
    %c0_2 = arith.constant 0 : index
    %c0_3 = arith.constant 0 : index
    %c0_4 = arith.constant 0 : index
    %1 = vector.load %arg2[%c0_2, %c0_3, %c0_4] : memref<2x8x128xf32, #tpu.memory_space<vmem>>, vector<2x8x128xf32>
    %2 = vector.shape_cast %0 : vector<2x8x128xf32> to vector<16x128xf32>
    %c0_5 = arith.constant 0 : index
    %c0_6 = arith.constant 0 : index
    %3 = vector.load %arg4[%c0_5, %c0_6] : memref<128x128xf32, #tpu.memory_space<vmem>>, vector<128x128xf32>
    %cst = arith.constant dense<0.000000e+00> : vector<16x128xf32>
    %4 = tpu.matmul %2, %3, %cst {dimension_numbers = #tpu.dot_dimension_numbers<[1], [0], [0], [1], [0, 0, 1, 1], [], []>} : vector<16x128xf32>, vector<128x128xf32>, vector<16x128xf32> -> vector<16x128xf32>
    %5 = vector.shape_cast %4 : vector<16x128xf32> to vector<2x8x128xf32>
    "tpu.trace_start"() <{level = 10 : i32, message = "bqh,bsh->bqs"}> : () -> ()
    %cst_7 = arith.constant dense<0.000000e+00> : vector<2x8x8xf32>
    %6 = tpu.matmul %5, %1, %cst_7 {dimension_numbers = #tpu.dot_dimension_numbers<[2], [2], [1], [1], [0, 0, 0, 1, 1, 1], [0], [0]>} : vector<2x8x128xf32>, vector<2x8x128xf32>, vector<2x8x8xf32> -> vector<2x8x8xf32>
    "tpu.trace_stop"() : () -> ()
    %c0_8 = arith.constant 0 : index
    %c0_9 = arith.constant 0 : index
    %c0_10 = arith.constant 0 : index
    %7 = vector.load %arg3[%c0_8, %c0_9, %c0_10] : memref<2x1x8xf32, #tpu.memory_space<vmem>>, vector<2x1x8xf32>
    %8 = vector.broadcast %7 : vector<2x1x8xf32> to vector<2x8x8xf32>
    %9 = arith.addf %6, %8 : vector<2x8x8xf32>
    %cst_11 = arith.constant dense<0xFF800000> : vector<2x8xf32>
    %10 = vector.multi_reduction <maximumf>, %9, %cst_11 [2] : vector<2x8x8xf32> to vector<2x8xf32>
    %11 = vector.shape_cast %10 : vector<2x8xf32> to vector<2x8x1xf32>
    %12 = vector.broadcast %11 : vector<2x8x1xf32> to vector<2x8x8xf32>
    %13 = arith.subf %9, %12 : vector<2x8x8xf32>
    %14 = math.exp %13 : vector<2x8x8xf32>
    %cst_12 = arith.constant dense<0.000000e+00> : vector<2x8xf32>
    %15 = vector.multi_reduction <add>, %14, %cst_12 [2] : vector<2x8x8xf32> to vector<2x8xf32>
    %16 = vector.shape_cast %15 : vector<2x8xf32> to vector<2x8x1xf32>
    %17 = tpu.reciprocal %16 : vector<2x8x1xf32> -> vector<2x8x1xf32>
    %18 = vector.broadcast %17 : vector<2x8x1xf32> to vector<2x8x8xf32>
    %19 = arith.mulf %14, %18 : vector<2x8x8xf32>
    "tpu.trace_start"() <{level = 10 : i32, message = "bqs,bsh->bqh"}> : () -> ()
    %cst_13 = arith.constant dense<0.000000e+00> : vector<2x8x128xf32>
    %20 = tpu.matmul %19, %1, %cst_13 {dimension_numbers = #tpu.dot_dimension_numbers<[2], [1], [1], [2], [0, 0, 0, 1, 1, 2], [0], [0]>} : vector<2x8x8xf32>, vector<2x8x128xf32>, vector<2x8x128xf32> -> vector<2x8x128xf32>
    "tpu.trace_stop"() : () -> ()
    %21 = vector.shape_cast %20 : vector<2x8x128xf32> to vector<16x128xf32>
    %22 = tpu.concatenate %21, %4 in 1 : vector<16x128xf32>, vector<16x128xf32> -> vector<16x256xf32>
    %c0_14 = arith.constant 0 : index
    %c0_15 = arith.constant 0 : index
    %23 = vector.load %arg5[%c0_14, %c0_15] : memref<256x128xf32, #tpu.memory_space<vmem>>, vector<256x128xf32>
    %cst_16 = arith.constant dense<0.000000e+00> : vector<16x128xf32>
    %24 = tpu.matmul %22, %23, %cst_16 {dimension_numbers = #tpu.dot_dimension_numbers<[1], [0], [0], [1], [0, 0, 1, 1], [], []>} : vector<16x256xf32>, vector<256x128xf32>, vector<16x128xf32> -> vector<16x128xf32>
    %c0_17 = arith.constant 0 : index
    %c0_18 = arith.constant 0 : index
    %25 = vector.load %arg6[%c0_17, %c0_18] : memref<1x128xf32, #tpu.memory_space<vmem>>, vector<1x128xf32>
    %26 = vector.broadcast %25 : vector<1x128xf32> to vector<16x128xf32>
    %27 = arith.addf %24, %26 : vector<16x128xf32>
    %28 = math.tanh %27 : vector<16x128xf32>
    %29 = vector.shape_cast %28 : vector<16x128xf32> to vector<2x8x128xf32>
    %c0_19 = arith.constant 0 : index
    %c0_20 = arith.constant 0 : index
    %c0_21 = arith.constant 0 : index
    %30 = vector.load %arg7[%c0_19, %c0_20, %c0_21] : memref<2x8x128xf32, #tpu.memory_space<vmem>>, vector<2x8x128xf32>
    tpu.vector_store %arg7[%c0_19, %c0_20, %c0_21], %29 {strides = array<i32>} : memref<2x8x128xf32, #tpu.memory_space<vmem>>, vector<2x8x128xf32>,
    return
  }
  func.func @transform_0(%arg0: i32) -> (i32, i32, i32) {
    %c0_i32 = arith.constant 0 : i32
    %c0_i32_0 = arith.constant 0 : i32
    %c0_i32_1 = arith.constant 0 : i32
    return %arg0, %c0_i32, %c0_i32_0 : i32, i32, i32
  }
  func.func @transform_1(%arg0: i32) -> (i32, i32, i32) {
    %c0_i32 = arith.constant 0 : i32
    %c0_i32_0 = arith.constant 0 : i32
    %c0_i32_1 = arith.constant 0 : i32
    return %arg0, %c0_i32, %c0_i32_0 : i32, i32, i32
  }
  func.func @transform_2(%arg0: i32) -> (i32, i32, i32) {
    %c0_i32 = arith.constant 0 : i32
    %c0_i32_0 = arith.constant 0 : i32
    %c0_i32_1 = arith.constant 0 : i32
    return %arg0, %c0_i32, %c0_i32_0 : i32, i32, i32
  }
  func.func @transform_3(%arg0: i32) -> (i32, i32) {
    %c0_i32 = arith.constant 0 : i32
    %c0_i32_0 = arith.constant 0 : i32
    %c0_i32_1 = arith.constant 0 : i32
    return %c0_i32, %c0_i32_0 : i32, i32
  }
  func.func @transform_4(%arg0: i32) -> (i32, i32) {
    %c0_i32 = arith.constant 0 : i32
    %c0_i32_0 = arith.constant 0 : i32
    %c0_i32_1 = arith.constant 0 : i32
    return %c0_i32, %c0_i32_0 : i32, i32
  }
  func.func @transform_5(%arg0: i32) -> (i32, i32) {
    %c0_i32 = arith.constant 0 : i32
    %c0_i32_0 = arith.constant 0 : i32
    %c0_i32_1 = arith.constant 0 : i32
    return %c0_i32, %c0_i32_0 : i32, i32
  }
  func.func @transform_6(%arg0: i32) -> (i32, i32, i32) {
    %c0_i32 = arith.constant 0 : i32
    %c0_i32_0 = arith.constant 0 : i32
    %c0_i32_1 = arith.constant 0 : i32
    return %arg0, %c0_i32, %c0_i32_0 : i32, i32, i32
  }
}

</mosaic_0001>

<llo_original>
// kernel: tpu_custom_call.1
$region0: #{tpu_custom_call.1}
  #allocation0 [shape = 'u32[]', space=smem, size = 0x4, offset = 0x4, fixed_abs, tag = 'smem constant byte address 0x4 - core index']
  #allocation1 [shape = 'u32[144,128]{1,0:T(1,128)}', space=vmem, size = 0x12000, scoped, tag = 'internal scratch']
  %s0 = inlined_call_operand.hbm [shape: f32[2,8,128], index: 0, kind: input, shape index: {}]
  %s1 = inlined_call_operand.hbm [shape: f32[2,8,128], index: 1, kind: input, shape index: {}]
  %s2 = inlined_call_operand.vmem [shape: f32[2,1,8], index: 2, kind: input, shape index: {}]
  %s3 = inlined_call_operand.hbm [shape: f32[128,128], index: 3, kind: input, shape index: {}]
  %s4 = inlined_call_operand.hbm [shape: f32[256,128], index: 4, kind: input, shape index: {}]
  %s5 = inlined_call_operand.vmem [shape: f32[1,128], index: 5, kind: input, shape index: {}]
  %s6 = inlined_call_operand.hbm [shape: f32[2,8,128], index: 6, kind: output, shape index: {}]
  %s7 = sld [smem:[#allocation0]]
  $region50: #{tpu_custom_call.1} parent=0
    _
  %s9 = ssub.s32 1, %s7
  %s10 = scalar_select 0, %s9, %s7
  $region1: #{tpu_custom_call.1} parent=0
    #allocation2 [shape = 'u8[8192]{0}', space=vmem, size = 0x2000, scoped, tag = 'input window, operand 0, single buffered']
    #allocation3 [shape = 's32[1]{0}', space=sflag, size = 0x4, scoped, tag = 'scoped memory for tpu_custom_call.1']
    #allocation4 [shape = 's32[1]{0}', space=sflag, size = 0x4, scoped, tag = 'scoped memory for tpu_custom_call.1']
    #allocation5 [shape = 'u8[8192]{0}', space=vmem, size = 0x2000, scoped, tag = 'input window, operand 1, single buffered']
    #allocation6 [shape = 's32[1]{0}', space=sflag, size = 0x4, scoped, tag = 'scoped memory for tpu_custom_call.1']
    #allocation7 [shape = 'u8[65536]{0}', space=vmem, size = 0x10000, scoped, tag = 'input window, operand 3, single buffered']
    #allocation8 [shape = 'u8[131072]{0}', space=vmem, size = 0x20000, scoped, tag = 'input window, operand 4, single buffered']
    #allocation9 [shape = 's32[1]{0}', space=sflag, size = 0x4, scoped, tag = 'scoped memory for tpu_custom_call.1']
    #allocation10 [shape = 'u8[8192]{0}', space=vmem, size = 0x2000, scoped, tag = 'output window, operand 0, single buffered']
    %11 = vsyncpa [#allocation3], 0
    %12 = vsyncpa [#allocation6], 0
    %13 = vsyncpa [#allocation9], 0
    %14 = vsyncpa [#allocation4], 0
    // Predicated region
    $region2: #{tpu_custom_call.1} parent=1 // pred_check
      _
    $region3: #{tpu_custom_call.1} parent=1 // pred_check_branch
      %16 = sbr.rel (0) target = $region5
    $region4: #{tpu_custom_call.1} parent=1 // pred_region
      %s18 = ssub.s32 256, 256
      %19 = vsyncadd [#allocation3], %s18
      %s20 = sshll.u32 [#allocation2], 4
      %s21 = int_to_ptr.vmem [resolvable:$true] %s20
      %26 = dma.hbm_to_vmem [thread:$0]  %s0, 256, %s21, [#allocation3], 128, 128, 8
    $region5: #{tpu_custom_call.1} parent=1 // pred_fallthru
      _
    // Predicated region
    $region6: #{tpu_custom_call.1} parent=1 // pred_check
      _
    $region7: #{tpu_custom_call.1} parent=1 // pred_check_branch
      %28 = sbr.rel (0) target = $region9
    $region8: #{tpu_custom_call.1} parent=1 // pred_region
      %s30 = ssub.s32 256, 256
      %31 = vsyncadd [#allocation6], %s30
      %s32 = sshll.u32 [#allocation5], 4
      %s33 = int_to_ptr.vmem [resolvable:$true] %s32
      %38 = dma.hbm_to_vmem [thread:$0]  %s1, 256, %s33, [#allocation6], 128, 128, 8
    $region9: #{tpu_custom_call.1} parent=1 // pred_fallthru
      _
    // Predicated region
    $region10: #{tpu_custom_call.1} parent=1 // pred_check
      _
    $region11: #{tpu_custom_call.1} parent=1 // pred_check_branch
      %40 = sbr.rel (0) target = $region13
    $region12: #{tpu_custom_call.1} parent=1 // pred_region
      _
    $region13: #{tpu_custom_call.1} parent=1 // pred_fallthru
      _
    // Predicated region
    $region14: #{tpu_custom_call.1} parent=1 // pred_check
      _
    $region15: #{tpu_custom_call.1} parent=1 // pred_check_branch
      %42 = sbr.rel (0) target = $region17
    $region16: #{tpu_custom_call.1} parent=1 // pred_region
      %s44 = ssub.s32 2048, 2048
      %45 = vsyncadd [#allocation6], %s44
      %s46 = sshll.u32 [#allocation7], 4
      %s47 = int_to_ptr.vmem [resolvable:$true] %s46
      %52 = dma.hbm_to_vmem [thread:$0]  %s3, 2048, %s47, [#allocation6], 128, 128, 8
    $region17: #{tpu_custom_call.1} parent=1 // pred_fallthru
      _
    // Predicated region
    $region18: #{tpu_custom_call.1} parent=1 // pred_check
      _
    $region19: #{tpu_custom_call.1} parent=1 // pred_check_branch
      %54 = sbr.rel (0) target = $region21
    $region20: #{tpu_custom_call.1} parent=1 // pred_region
      %s56 = ssub.s32 4096, 4096
      %57 = vsyncadd [#allocation9], %s56
      %s58 = sshll.u32 [#allocation8], 4
      %s59 = int_to_ptr.vmem [resolvable:$true] %s58
      %64 = dma.hbm_to_vmem [thread:$0]  %s4, 4096, %s59, [#allocation9], 128, 128, 8
    $region21: #{tpu_custom_call.1} parent=1 // pred_fallthru
      _
    // Predicated region
    $region22: #{tpu_custom_call.1} parent=1 // pred_check
      _
    $region23: #{tpu_custom_call.1} parent=1 // pred_check_branch
      %66 = sbr.rel (0) target = $region25
    $region24: #{tpu_custom_call.1} parent=1 // pred_region
      _
    $region25: #{tpu_custom_call.1} parent=1 // pred_fallthru
      _
    // Predicated region
    $region26: #{tpu_custom_call.1} parent=1 // pred_check
      _
    $region27: #{tpu_custom_call.1} parent=1 // pred_check_branch
      %68 = sbr.rel (0) target = $region29
    $region28: #{tpu_custom_call.1} parent=1 // pred_region
      %69 = dma.done [#allocation3], 256
    $region29: #{tpu_custom_call.1} parent=1 // pred_fallthru
      _
    // Predicated region
    $region30: #{tpu_custom_call.1} parent=1 // pred_check
      _
    $region31: #{tpu_custom_call.1} parent=1 // pred_check_branch
      %71 = sbr.rel (0) target = $region33
    $region32: #{tpu_custom_call.1} parent=1 // pred_region
      %72 = dma.done [#allocation6], 256
    $region33: #{tpu_custom_call.1} parent=1 // pred_fallthru
      _
    // Predicated region
    $region34: #{tpu_custom_call.1} parent=1 // pred_check
      _
    $region35: #{tpu_custom_call.1} parent=1 // pred_check_branch
      %74 = sbr.rel (0) target = $region37
    $region36: #{tpu_custom_call.1} parent=1 // pred_region
      %75 = dma.done [#allocation6], 2048
    $region37: #{tpu_custom_call.1} parent=1 // pred_fallthru
      _
    // Predicated region
    $region38: #{tpu_custom_call.1} parent=1 // pred_check
      _
    $region39: #{tpu_custom_call.1} parent=1 // pred_check_branch
      %77 = sbr.rel (0) target = $region41
    $region40: #{tpu_custom_call.1} parent=1 // pred_region
      %78 = dma.done [#allocation9], 4096
    $region41: #{tpu_custom_call.1} parent=1 // pred_fallthru
      _
    %v79 = vld [vmem:[#allocation2] sm:$0xff]
    %v80 = vld [vmem:[#allocation2 + $0x8] sm:$0xff]
    %v81 = vld [vmem:[#allocation5] sm:$0xff]
    %v82 = vld [vmem:[#allocation5 + $0x8] sm:$0xff]
    %v83 = vld [vmem:[#allocation7] sm:$0xff]
    %v84 = vld [vmem:[#allocation7 + $0x8] sm:$0xff]
    %v85 = vld [vmem:[#allocation7 + $0x10] sm:$0xff]
    %v86 = vld [vmem:[#allocation7 + $0x18] sm:$0xff]
    %v87 = vld [vmem:[#allocation7 + $0x20] sm:$0xff]
    %v88 = vld [vmem:[#allocation7 + $0x28] sm:$0xff]
    %v89 = vld [vmem:[#allocation7 + $0x30] sm:$0xff]
    %v90 = vld [vmem:[#allocation7 + $0x38] sm:$0xff]
    %v91 = vld [vmem:[#allocation7 + $0x40] sm:$0xff]
    %v92 = vld [vmem:[#allocation7 + $0x48] sm:$0xff]
    %v93 = vld [vmem:[#allocation7 + $0x50] sm:$0xff]
    %v94 = vld [vmem:[#allocation7 + $0x58] sm:$0xff]
    %v95 = vld [vmem:[#allocation7 + $0x60] sm:$0xff]
    %v96 = vld [vmem:[#allocation7 + $0x68] sm:$0xff]
    %v97 = vld [vmem:[#allocation7 + $0x70] sm:$0xff]
    %v98 = vld [vmem:[#allocation7 + $0x78] sm:$0xff]
    %99 = vmatprep.subr.mxu0 0.0
    %100 = vmatpush1.msra.mxu0 %v83
    %101 = vmatprep.subr.mxu0 0.0
    %102 = vmatpush1.msra.mxu0 %v84
    %103 = vmatprep.subr.mxu0 0.0
    %104 = vmatpush1.msra.mxu0 %v85
    %105 = vmatprep.subr.mxu0 0.0
    %106 = vmatpush1.msra.mxu0 %v86
    %107 = vmatprep.subr.mxu0 0.0
    %108 = vmatpush1.msra.mxu0 %v87
    %109 = vmatprep.subr.mxu0 0.0
    %110 = vmatpush1.msra.mxu0 %v88
    %111 = vmatprep.subr.mxu0 0.0
    %112 = vmatpush1.msra.mxu0 %v89
    %113 = vmatprep.subr.mxu0 0.0
    %114 = vmatpush1.msra.mxu0 %v90
    %115 = vmatprep.subr.mxu0 0.0
    %116 = vmatpush1.msra.mxu0 %v91
    %117 = vmatprep.subr.mxu0 0.0
    %118 = vmatpush1.msra.mxu0 %v92
    %119 = vmatprep.subr.mxu0 0.0
    %120 = vmatpush1.msra.mxu0 %v93
    %121 = vmatprep.subr.mxu0 0.0
    %122 = vmatpush1.msra.mxu0 %v94
    %123 = vmatprep.subr.mxu0 0.0
    %124 = vmatpush1.msra.mxu0 %v95
    %125 = vmatprep.subr.mxu0 0.0
    %126 = vmatpush1.msra.mxu0 %v96
    %127 = vmatprep.subr.mxu0 0.0
    %128 = vmatpush1.msra.mxu0 %v97
    %129 = vmatprep.subr.mxu0 0.0
    %130 = vmatpush1.msra.mxu0 %v98
    %131 = vmatprep.subr.mxu0 0.0
    %132 = vmatpush1.msra.mxu0 0.0
    %133 = vmatprep.subr.mxu0 0.0
    %134 = vmatpush1.msra.mxu0 0.0
    %135 = vmatprep.subr.mxu0 0.0
    %136 = vmatpush1.msra.mxu0 0.0
    %137 = vmatprep.subr.mxu0 0.0
    %138 = vmatpush1.msra.mxu0 0.0
    %139 = vmatprep.subr.mxu0 0.0
    %140 = vmatpush1.msra.mxu0 0.0
    %141 = vmatprep.subr.mxu0 0.0
    %142 = vmatpush1.msra.mxu0 0.0
    %143 = vmatprep.subr.mxu0 0.0
    %144 = vmatpush1.msra.mxu0 0.0
    %145 = vmatprep.subr.mxu0 0.0
    %146 = vmatpush1.msra.mxu0 0.0
    %147 = vmatprep.subr.mxu0 0.0
    %148 = vmatpush1.msra.mxu0 0.0
    %149 = vmatprep.subr.mxu0 0.0
    %150 = vmatpush1.msra.mxu0 0.0
    %151 = vmatprep.subr.mxu0 0.0
    %152 = vmatpush1.msra.mxu0 0.0
    %153 = vmatprep.subr.mxu0 0.0
    %154 = vmatpush1.msra.mxu0 0.0
    %155 = vmatprep.subr.mxu0 0.0
    %156 = vmatpush1.msra.mxu0 0.0
    %157 = vmatprep.subr.mxu0 0.0
    %158 = vmatpush1.msra.mxu0 0.0
    %159 = vmatprep.subr.mxu0 0.0
    %160 = vmatpush1.msra.mxu0 0.0
    %161 = vmatprep.subr.mxu0 0.0
    %162 = vmatpush1.msra.mxu0 0.0
    %163 = vmatprep.mubr.f32.mxu0 0.0
    %164 = vmatmul.mubr.f32.gmra.mrb[0].mxu0 %v79
    %v165 = vpop.f32.mrb[0].mxu0
    %v166 = vadd.f32 0.0, %v165
    %v167 = vpop.f32.mrb[0].mxu0
    %168 = vmatprep.mubr.f32.mxu0 0.0
    %169 = vmatmul.mubr.f32.gmra.mrb[0].mxu0 %v80
    %v170 = vpop.f32.mrb[0].mxu0
    %v171 = vadd.f32 0.0, %v170
    %v172 = vpop.f32.mrb[0].mxu0
    %173 = vdwg.mxu0
    %v174 = vld [vmem:[%s2] sm:$0x1]
    %v175 = vld [vmem:[%s2 + $0x1] sm:$0x1]
    %v178 = vlaneseq
    %v179 = vshrl.u32 %v178, 7
    %v180 = vsub.s32 0, %v179
    %v181 = vrot.slane %v174, %v180
    %v182 = vlaneseq
    %v183 = vshrl.u32 %v182, 7
    %v184 = vsub.s32 0, %v183
    %v185 = vrot.slane %v175, %v184
    %188 = vmatprep.subr.mxu0 0.0
    %189 = vmatpush1.xpose.msra.mxu0 %v81
    %190 = vmatprep.subr.mxu0 0.0
    %191 = vmatpush1.xpose.msra.mxu0 0.0
    %192 = vmatprep.subr.mxu0 0.0
    %193 = vmatpush1.xpose.msra.mxu0 0.0
    %194 = vmatprep.subr.mxu0 0.0
    %195 = vmatpush1.xpose.msra.mxu0 0.0
    %196 = vmatprep.subr.mxu0 0.0
    %197 = vmatpush1.xpose.msra.mxu0 0.0
    %198 = vmatprep.subr.mxu0 0.0
    %199 = vmatpush1.xpose.msra.mxu0 0.0
    %200 = vmatprep.subr.mxu0 0.0
    %201 = vmatpush1.xpose.msra.mxu0 0.0
    %202 = vmatprep.subr.mxu0 0.0
    %203 = vmatpush1.xpose.msra.mxu0 0.0
    %204 = vmatprep.subr.mxu0 0.0
    %205 = vmatpush1.xpose.msra.mxu0 0.0
    %206 = vmatprep.subr.mxu0 0.0
    %207 = vmatpush1.xpose.msra.mxu0 0.0
    %208 = vmatprep.subr.mxu0 0.0
    %209 = vmatpush1.xpose.msra.mxu0 0.0
    %210 = vmatprep.subr.mxu0 0.0
    %211 = vmatpush1.xpose.msra.mxu0 0.0
    %212 = vmatprep.subr.mxu0 0.0
    %213 = vmatpush1.xpose.msra.mxu0 0.0
    %214 = vmatprep.subr.mxu0 0.0
    %215 = vmatpush1.xpose.msra.mxu0 0.0
    %216 = vmatprep.subr.mxu0 0.0
    %217 = vmatpush1.xpose.msra.mxu0 0.0
    %218 = vmatprep.subr.mxu0 0.0
    %219 = vmatpush1.xpose.msra.mxu0 0.0
    %220 = vmatprep.subr.mxu0 0.0
    %221 = vmatpush1.xpose.msra.mxu0 0.0
    %222 = vmatprep.subr.mxu0 0.0
    %223 = vmatpush1.xpose.msra.mxu0 0.0
    %224 = vmatprep.subr.mxu0 0.0
    %225 = vmatpush1.xpose.msra.mxu0 0.0
    %226 = vmatprep.subr.mxu0 0.0
    %227 = vmatpush1.xpose.msra.mxu0 0.0
    %228 = vmatprep.subr.mxu0 0.0
    %229 = vmatpush1.xpose.msra.mxu0 0.0
    %230 = vmatprep.subr.mxu0 0.0
    %231 = vmatpush1.xpose.msra.mxu0 0.0
    %232 = vmatprep.subr.mxu0 0.0
    %233 = vmatpush1.xpose.msra.mxu0 0.0
    %234 = vmatprep.subr.mxu0 0.0
    %235 = vmatpush1.xpose.msra.mxu0 0.0
    %236 = vmatprep.subr.mxu0 0.0
    %237 = vmatpush1.xpose.msra.mxu0 0.0
    %238 = vmatprep.subr.mxu0 0.0
    %239 = vmatpush1.xpose.msra.mxu0 0.0
    %240 = vmatprep.subr.mxu0 0.0
    %241 = vmatpush1.xpose.msra.mxu0 0.0
    %242 = vmatprep.subr.mxu0 0.0
    %243 = vmatpush1.xpose.msra.mxu0 0.0
    %244 = vmatprep.subr.mxu0 0.0
    %245 = vmatpush1.xpose.msra.mxu0 0.0
    %246 = vmatprep.subr.mxu0 0.0
    %247 = vmatpush1.xpose.msra.mxu0 0.0
    %248 = vmatprep.subr.mxu0 0.0
    %249 = vmatpush1.xpose.msra.mxu0 0.0
    %250 = vmatprep.subr.mxu0 0.0
    %251 = vmatpush1.xpose.msra.mxu0 0.0
    %252 = vmatprep.mubr.f32.mxu0 0.0
    %253 = vmatmul.mubr.f32.gmra.mrb[0].mxu0 %v166
    %v254 = vpop.f32.mrb[0].mxu0
    %v255 = vadd.f32 %v181, %v254
    %v256 = vpop.f32.mrb[0].mxu0
    %257 = vdwg.mxu0
    %258 = vmatprep.subr.mxu0 0.0
    %259 = vmatpush1.xpose.msra.mxu0 %v82
    %260 = vmatprep.subr.mxu0 0.0
    %261 = vmatpush1.xpose.msra.mxu0 0.0
    %262 = vmatprep.subr.mxu0 0.0
    %263 = vmatpush1.xpose.msra.mxu0 0.0
    %264 = vmatprep.subr.mxu0 0.0
    %265 = vmatpush1.xpose.msra.mxu0 0.0
    %266 = vmatprep.subr.mxu0 0.0
    %267 = vmatpush1.xpose.msra.mxu0 0.0
    %268 = vmatprep.subr.mxu0 0.0
    %269 = vmatpush1.xpose.msra.mxu0 0.0
    %270 = vmatprep.subr.mxu0 0.0
    %271 = vmatpush1.xpose.msra.mxu0 0.0
    %272 = vmatprep.subr.mxu0 0.0
    %273 = vmatpush1.xpose.msra.mxu0 0.0
    %274 = vmatprep.subr.mxu0 0.0
    %275 = vmatpush1.xpose.msra.mxu0 0.0
    %276 = vmatprep.subr.mxu0 0.0
    %277 = vmatpush1.xpose.msra.mxu0 0.0
    %278 = vmatprep.subr.mxu0 0.0
    %279 = vmatpush1.xpose.msra.mxu0 0.0
    %280 = vmatprep.subr.mxu0 0.0
    %281 = vmatpush1.xpose.msra.mxu0 0.0
    %282 = vmatprep.subr.mxu0 0.0
    %283 = vmatpush1.xpose.msra.mxu0 0.0
    %284 = vmatprep.subr.mxu0 0.0
    %285 = vmatpush1.xpose.msra.mxu0 0.0
    %286 = vmatprep.subr.mxu0 0.0
    %287 = vmatpush1.xpose.msra.mxu0 0.0
    %288 = vmatprep.subr.mxu0 0.0
    %289 = vmatpush1.xpose.msra.mxu0 0.0
    %290 = vmatprep.subr.mxu0 0.0
    %291 = vmatpush1.xpose.msra.mxu0 0.0
    %292 = vmatprep.subr.mxu0 0.0
    %293 = vmatpush1.xpose.msra.mxu0 0.0
    %294 = vmatprep.subr.mxu0 0.0
    %295 = vmatpush1.xpose.msra.mxu0 0.0
    %296 = vmatprep.subr.mxu0 0.0
    %297 = vmatpush1.xpose.msra.mxu0 0.0
    %298 = vmatprep.subr.mxu0 0.0
    %299 = vmatpush1.xpose.msra.mxu0 0.0
    %300 = vmatprep.subr.mxu0 0.0
    %301 = vmatpush1.xpose.msra.mxu0 0.0
    %302 = vmatprep.subr.mxu0 0.0
    %303 = vmatpush1.xpose.msra.mxu0 0.0
    %304 = vmatprep.subr.mxu0 0.0
    %305 = vmatpush1.xpose.msra.mxu0 0.0
    %306 = vmatprep.subr.mxu0 0.0
    %307 = vmatpush1.xpose.msra.mxu0 0.0
    %308 = vmatprep.subr.mxu0 0.0
    %309 = vmatpush1.xpose.msra.mxu0 0.0
    %310 = vmatprep.subr.mxu0 0.0
    %311 = vmatpush1.xpose.msra.mxu0 0.0
    %312 = vmatprep.subr.mxu0 0.0
    %313 = vmatpush1.xpose.msra.mxu0 0.0
    %314 = vmatprep.subr.mxu0 0.0
    %315 = vmatpush1.xpose.msra.mxu0 0.0
    %316 = vmatprep.subr.mxu0 0.0
    %317 = vmatpush1.xpose.msra.mxu0 0.0
    %318 = vmatprep.subr.mxu0 0.0
    %319 = vmatpush1.xpose.msra.mxu0 0.0
    %320 = vmatprep.subr.mxu0 0.0
    %321 = vmatpush1.xpose.msra.mxu0 0.0
    %322 = vmatprep.mubr.f32.mxu0 0.0
    %323 = vmatmul.mubr.f32.gmra.mrb[0].mxu0 %v171
    %v324 = vpop.f32.mrb[0].mxu0
    %v325 = vadd.f32 %v185, %v324
    %v326 = vpop.f32.mrb[0].mxu0
    %327 = vdwg.mxu0
    %vm328 = vcmask 64512
    %v329 = vsel %vm328, %v255, -inf
    %330 = vmax.xlane.f32.xlu0 %v329
    %v331 = vpop.xlane.xlu0 %330
    %v332 = vsel %vm328, %v325, -inf
    %333 = vmax.xlane.f32.xlu0 %v332
    %v334 = vpop.xlane.xlu0 %333
    %v335 = vsub.f32 %v255, %v331
    %v336 = vsub.f32 %v325, %v334
    %v337 = vmul.f32 %v335, 1.442695
    %v338 = vpow.pop %v337
    %v339 = vmul.f32 %v336, 1.442695
    %v340 = vpow.pop %v339
    %v341 = vsel %vm328, %v338, 0.0
    %342 = vadd.xlane.f32.xlu0 %v341
    %v343 = vpop.xlane.xlu0 %342
    %v344 = vsel %vm328, %v340, 0.0
    %345 = vadd.xlane.f32.xlu0 %v344
    %v346 = vpop.xlane.xlu0 %345
    %v347 = vrcp.pop %v343
    %v348 = vrcp.pop %v346
    %v349 = vmul.f32 %v338, %v347
    %v350 = vmul.f32 %v340, %v348
    %v352 = vsel %vm328, %v349, 0
    %354 = vmatprep.subr.mxu0 0.0
    %355 = vmatpush1.msra.mxu0 %v81
    %356 = vmatprep.subr.mxu0 0.0
    %357 = vmatpush1.msra.mxu0 0.0
    %358 = vmatprep.subr.mxu0 0.0
    %359 = vmatpush1.msra.mxu0 0.0
    %360 = vmatprep.subr.mxu0 0.0
    %361 = vmatpush1.msra.mxu0 0.0
    %362 = vmatprep.subr.mxu0 0.0
    %363 = vmatpush1.msra.mxu0 0.0
    %364 = vmatprep.subr.mxu0 0.0
    %365 = vmatpush1.msra.mxu0 0.0
    %366 = vmatprep.subr.mxu0 0.0
    %367 = vmatpush1.msra.mxu0 0.0
    %368 = vmatprep.subr.mxu0 0.0
    %369 = vmatpush1.msra.mxu0 0.0
    %370 = vmatprep.subr.mxu0 0.0
    %371 = vmatpush1.msra.mxu0 0.0
    %372 = vmatprep.subr.mxu0 0.0
    %373 = vmatpush1.msra.mxu0 0.0
    %374 = vmatprep.subr.mxu0 0.0
    %375 = vmatpush1.msra.mxu0 0.0
    %376 = vmatprep.subr.mxu0 0.0
    %377 = vmatpush1.msra.mxu0 0.0
    %378 = vmatprep.subr.mxu0 0.0
    %379 = vmatpush1.msra.mxu0 0.0
    %380 = vmatprep.subr.mxu0 0.0
    %381 = vmatpush1.msra.mxu0 0.0
    %382 = vmatprep.subr.mxu0 0.0
    %383 = vmatpush1.msra.mxu0 0.0
    %384 = vmatprep.subr.mxu0 0.0
    %385 = vmatpush1.msra.mxu0 0.0
    %386 = vmatprep.subr.mxu0 0.0
    %387 = vmatpush1.msra.mxu0 0.0
    %388 = vmatprep.subr.mxu0 0.0
    %389 = vmatpush1.msra.mxu0 0.0
    %390 = vmatprep.subr.mxu0 0.0
    %391 = vmatpush1.msra.mxu0 0.0
    %392 = vmatprep.subr.mxu0 0.0
    %393 = vmatpush1.msra.mxu0 0.0
    %394 = vmatprep.subr.mxu0 0.0
    %395 = vmatpush1.msra.mxu0 0.0
    %396 = vmatprep.subr.mxu0 0.0
    %397 = vmatpush1.msra.mxu0 0.0
    %398 = vmatprep.subr.mxu0 0.0
    %399 = vmatpush1.msra.mxu0 0.0
    %400 = vmatprep.subr.mxu0 0.0
    %401 = vmatpush1.msra.mxu0 0.0
    %402 = vmatprep.subr.mxu0 0.0
    %403 = vmatpush1.msra.mxu0 0.0
    %404 = vmatprep.subr.mxu0 0.0
    %405 = vmatpush1.msra.mxu0 0.0
    %406 = vmatprep.subr.mxu0 0.0
    %407 = vmatpush1.msra.mxu0 0.0
    %408 = vmatprep.subr.mxu0 0.0
    %409 = vmatpush1.msra.mxu0 0.0
    %410 = vmatprep.subr.mxu0 0.0
    %411 = vmatpush1.msra.mxu0 0.0
    %412 = vmatprep.subr.mxu0 0.0
    %413 = vmatpush1.msra.mxu0 0.0
    %414 = vmatprep.subr.mxu0 0.0
    %415 = vmatpush1.msra.mxu0 0.0
    %416 = vmatprep.subr.mxu0 0.0
    %417 = vmatpush1.msra.mxu0 0.0
    %418 = vmatprep.mubr.f32.mxu0 0.0
    %419 = vmatmul.mubr.f32.gmra.mrb[0].mxu0 %v352
    %v420 = vpop.f32.mrb[0].mxu0
    %v421 = vadd.f32 0.0, %v420
    %v422 = vpop.f32.mrb[0].mxu0
    %423 = vdwg.mxu0
    %v425 = vsel %vm328, %v350, 0
    %427 = vmatprep.subr.mxu0 0.0
    %428 = vmatpush1.msra.mxu0 %v82
    %429 = vmatprep.subr.mxu0 0.0
    %430 = vmatpush1.msra.mxu0 0.0
    %431 = vmatprep.subr.mxu0 0.0
    %432 = vmatpush1.msra.mxu0 0.0
    %433 = vmatprep.subr.mxu0 0.0
    %434 = vmatpush1.msra.mxu0 0.0
    %435 = vmatprep.subr.mxu0 0.0
    %436 = vmatpush1.msra.mxu0 0.0
    %437 = vmatprep.subr.mxu0 0.0
    %438 = vmatpush1.msra.mxu0 0.0
    %439 = vmatprep.subr.mxu0 0.0
    %440 = vmatpush1.msra.mxu0 0.0
    %441 = vmatprep.subr.mxu0 0.0
    %442 = vmatpush1.msra.mxu0 0.0
    %443 = vmatprep.subr.mxu0 0.0
    %444 = vmatpush1.msra.mxu0 0.0
    %445 = vmatprep.subr.mxu0 0.0
    %446 = vmatpush1.msra.mxu0 0.0
    %447 = vmatprep.subr.mxu0 0.0
    %448 = vmatpush1.msra.mxu0 0.0
    %449 = vmatprep.subr.mxu0 0.0
    %450 = vmatpush1.msra.mxu0 0.0
    %451 = vmatprep.subr.mxu0 0.0
    %452 = vmatpush1.msra.mxu0 0.0
    %453 = vmatprep.subr.mxu0 0.0
    %454 = vmatpush1.msra.mxu0 0.0
    %455 = vmatprep.subr.mxu0 0.0
    %456 = vmatpush1.msra.mxu0 0.0
    %457 = vmatprep.subr.mxu0 0.0
    %458 = vmatpush1.msra.mxu0 0.0
    %459 = vmatprep.subr.mxu0 0.0
    %460 = vmatpush1.msra.mxu0 0.0
    %461 = vmatprep.subr.mxu0 0.0
    %462 = vmatpush1.msra.mxu0 0.0
    %463 = vmatprep.subr.mxu0 0.0
    %464 = vmatpush1.msra.mxu0 0.0
    %465 = vmatprep.subr.mxu0 0.0
    %466 = vmatpush1.msra.mxu0 0.0
    %467 = vmatprep.subr.mxu0 0.0
    %468 = vmatpush1.msra.mxu0 0.0
    %469 = vmatprep.subr.mxu0 0.0
    %470 = vmatpush1.msra.mxu0 0.0
    %471 = vmatprep.subr.mxu0 0.0
    %472 = vmatpush1.msra.mxu0 0.0
    %473 = vmatprep.subr.mxu0 0.0
    %474 = vmatpush1.msra.mxu0 0.0
    %475 = vmatprep.subr.mxu0 0.0
    %476 = vmatpush1.msra.mxu0 0.0
    %477 = vmatprep.subr.mxu0 0.0
    %478 = vmatpush1.msra.mxu0 0.0
    %479 = vmatprep.subr.mxu0 0.0
    %480 = vmatpush1.msra.mxu0 0.0
    %481 = vmatprep.subr.mxu0 0.0
    %482 = vmatpush1.msra.mxu0 0.0
    %483 = vmatprep.subr.mxu0 0.0
    %484 = vmatpush1.msra.mxu0 0.0
    %485 = vmatprep.subr.mxu0 0.0
    %486 = vmatpush1.msra.mxu0 0.0
    %487 = vmatprep.subr.mxu0 0.0
    %488 = vmatpush1.msra.mxu0 0.0
    %489 = vmatprep.subr.mxu0 0.0
    %490 = vmatpush1.msra.mxu0 0.0
    %491 = vmatprep.mubr.f32.mxu0 0.0
    %492 = vmatmul.mubr.f32.gmra.mrb[0].mxu0 %v425
    %v493 = vpop.f32.mrb[0].mxu0
    %v494 = vadd.f32 0.0, %v493
    %v495 = vpop.f32.mrb[0].mxu0
    %496 = vdwg.mxu0
    %v497 = vld [vmem:[#allocation8] sm:$0xff]
    %v498 = vld [vmem:[#allocation8 + $0x8] sm:$0xff]
    %v499 = vld [vmem:[#allocation8 + $0x10] sm:$0xff]
    %v500 = vld [vmem:[#allocation8 + $0x18] sm:$0xff]
    %v501 = vld [vmem:[#allocation8 + $0x20] sm:$0xff]
    %v502 = vld [vmem:[#allocation8 + $0x28] sm:$0xff]
    %v503 = vld [vmem:[#allocation8 + $0x30] sm:$0xff]
    %v504 = vld [vmem:[#allocation8 + $0x38] sm:$0xff]
    %v505 = vld [vmem:[#allocation8 + $0x40] sm:$0xff]
    %v506 = vld [vmem:[#allocation8 + $0x48] sm:$0xff]
    %v507 = vld [vmem:[#allocation8 + $0x50] sm:$0xff]
    %v508 = vld [vmem:[#allocation8 + $0x58] sm:$0xff]
    %v509 = vld [vmem:[#allocation8 + $0x60] sm:$0xff]
    %v510 = vld [vmem:[#allocation8 + $0x68] sm:$0xff]
    %v511 = vld [vmem:[#allocation8 + $0x70] sm:$0xff]
    %v512 = vld [vmem:[#allocation8 + $0x78] sm:$0xff]
    %v513 = vld [vmem:[#allocation8 + $0x80] sm:$0xff]
    %v514 = vld [vmem:[#allocation8 + $0x88] sm:$0xff]
    %v515 = vld [vmem:[#allocation8 + $0x90] sm:$0xff]
    %v516 = vld [vmem:[#allocation8 + $0x98] sm:$0xff]
    %v517 = vld [vmem:[#allocation8 + $0xa0] sm:$0xff]
    %v518 = vld [vmem:[#allocation8 + $0xa8] sm:$0xff]
    %v519 = vld [vmem:[#allocation8 + $0xb0] sm:$0xff]
    %v520 = vld [vmem:[#allocation8 + $0xb8] sm:$0xff]
    %v521 = vld [vmem:[#allocation8 + $0xc0] sm:$0xff]
    %v522 = vld [vmem:[#allocation8 + $0xc8] sm:$0xff]
    %v523 = vld [vmem:[#allocation8 + $0xd0] sm:$0xff]
    %v524 = vld [vmem:[#allocation8 + $0xd8] sm:$0xff]
    %v525 = vld [vmem:[#allocation8 + $0xe0] sm:$0xff]
    %v526 = vld [vmem:[#allocation8 + $0xe8] sm:$0xff]
    %v527 = vld [vmem:[#allocation8 + $0xf0] sm:$0xff]
    %v528 = vld [vmem:[#allocation8 + $0xf8] sm:$0xff]
    %v529 = vld [vmem:[%s5] sm:$0x1]
    %v531 = vlaneseq
    %v532 = vshrl.u32 %v531, 7
    %v533 = vsub.s32 0, %v532
    %v534 = vrot.slane %v529, %v533
    %536 = vmatprep.subr.mxu0 0.0
    %537 = vmatpush1.msra.mxu0 %v497
    %538 = vmatprep.subr.mxu0 0.0
    %539 = vmatpush1.msra.mxu0 %v498
    %540 = vmatprep.subr.mxu0 0.0
    %541 = vmatpush1.msra.mxu0 %v499
    %542 = vmatprep.subr.mxu0 0.0
    %543 = vmatpush1.msra.mxu0 %v500
    %544 = vmatprep.subr.mxu0 0.0
    %545 = vmatpush1.msra.mxu0 %v501
    %546 = vmatprep.subr.mxu0 0.0
    %547 = vmatpush1.msra.mxu0 %v502
    %548 = vmatprep.subr.mxu0 0.0
    %549 = vmatpush1.msra.mxu0 %v503
    %550 = vmatprep.subr.mxu0 0.0
    %551 = vmatpush1.msra.mxu0 %v504
    %552 = vmatprep.subr.mxu0 0.0
    %553 = vmatpush1.msra.mxu0 %v505
    %554 = vmatprep.subr.mxu0 0.0
    %555 = vmatpush1.msra.mxu0 %v506
    %556 = vmatprep.subr.mxu0 0.0
    %557 = vmatpush1.msra.mxu0 %v507
    %558 = vmatprep.subr.mxu0 0.0
    %559 = vmatpush1.msra.mxu0 %v508
    %560 = vmatprep.subr.mxu0 0.0
    %561 = vmatpush1.msra.mxu0 %v509
    %562 = vmatprep.subr.mxu0 0.0
    %563 = vmatpush1.msra.mxu0 %v510
    %564 = vmatprep.subr.mxu0 0.0
    %565 = vmatpush1.msra.mxu0 %v511
    %566 = vmatprep.subr.mxu0 0.0
    %567 = vmatpush1.msra.mxu0 %v512
    %568 = vmatprep.subr.mxu0 0.0
    %569 = vmatpush1.msra.mxu0 %v513
    %570 = vmatprep.subr.mxu0 0.0
    %571 = vmatpush1.msra.mxu0 %v514
    %572 = vmatprep.subr.mxu0 0.0
    %573 = vmatpush1.msra.mxu0 %v515
    %574 = vmatprep.subr.mxu0 0.0
    %575 = vmatpush1.msra.mxu0 %v516
    %576 = vmatprep.subr.mxu0 0.0
    %577 = vmatpush1.msra.mxu0 %v517
    %578 = vmatprep.subr.mxu0 0.0
    %579 = vmatpush1.msra.mxu0 %v518
    %580 = vmatprep.subr.mxu0 0.0
    %581 = vmatpush1.msra.mxu0 %v519
    %582 = vmatprep.subr.mxu0 0.0
    %583 = vmatpush1.msra.mxu0 %v520
    %584 = vmatprep.subr.mxu0 0.0
    %585 = vmatpush1.msra.mxu0 %v521
    %586 = vmatprep.subr.mxu0 0.0
    %587 = vmatpush1.msra.mxu0 %v522
    %588 = vmatprep.subr.mxu0 0.0
    %589 = vmatpush1.msra.mxu0 %v523
    %590 = vmatprep.subr.mxu0 0.0
    %591 = vmatpush1.msra.mxu0 %v524
    %592 = vmatprep.subr.mxu0 0.0
    %593 = vmatpush1.msra.mxu0 %v525
    %594 = vmatprep.subr.mxu0 0.0
    %595 = vmatpush1.msra.mxu0 %v526
    %596 = vmatprep.subr.mxu0 0.0
    %597 = vmatpush1.msra.mxu0 %v527
    %598 = vmatprep.subr.mxu0 0.0
    %599 = vmatpush1.msra.mxu0 %v528
    %600 = vmatprep.mubr.f32.mxu0 %v166
    %601 = vmatmul.mubr.f32.gmra.mrb[0].mxu0 %v421
    %v602 = vpop.f32.mrb[0].mxu0
    %v603 = vadd.f32 %v534, %v602
    %v604 = vpop.f32.mrb[0].mxu0
    %605 = vmatprep.mubr.f32.mxu0 %v171
    %606 = vmatmul.mubr.f32.gmra.mrb[0].mxu0 %v494
    %v607 = vpop.f32.mrb[0].mxu0
    %v608 = vadd.f32 %v534, %v607
    %v609 = vpop.f32.mrb[0].mxu0
    %610 = vdwg.mxu0
    %v611 = vtanh.pop %v603
    %v612 = vtanh.pop %v608
    %613 = vst [vmem:[#allocation10] sm:$0xff] %v611
    %614 = vst [vmem:[#allocation10 + $0x8] sm:$0xff] %v612
    // Predicated region
    $region42: #{tpu_custom_call.1} parent=1 // pred_check
      _
    $region43: #{tpu_custom_call.1} parent=1 // pred_check_branch
      %616 = sbr.rel (0) target = $region45
    $region44: #{tpu_custom_call.1} parent=1 // pred_region
      %s618 = ssub.s32 256, 256
      %619 = vsyncadd [#allocation4], %s618
      %s620 = sshll.u32 [#allocation10], 4
      %s621 = int_to_ptr.vmem [resolvable:$true] %s620
      %626 = dma.vmem_to_hbm [thread:$0]  %s621, 256, %s6, [#allocation4], 128, 128, 8
    $region45: #{tpu_custom_call.1} parent=1 // pred_fallthru
      _
    // Predicated region
    $region46: #{tpu_custom_call.1} parent=1 // pred_check
      _
    $region47: #{tpu_custom_call.1} parent=1 // pred_check_branch
      %628 = sbr.rel (0) target = $region49
    $region48: #{tpu_custom_call.1} parent=1 // pred_region
      %629 = dma.done [#allocation4], 256
    $region49: #{tpu_custom_call.1} parent=1 // pred_fallthru
      _
    %630 = vsyncpa [#allocation3], 1
    %631 = vsyncpa [#allocation6], 1
    %632 = vsyncpa [#allocation9], 1
    %633 = vsyncpa [#allocation4], 1

</llo_original>
